<compile_context>
chip_gen: v5e
topology: v5e:2x2
jax: 0.10.0
libtpu: 0.0.40
codegen_flags: <defaults>
</compile_context>

<pallas_src>
import jax
import jax.numpy as jnp
from jax.experimental import pallas as pl
from jax.experimental.pallas import tpu as pltpu

ADDITIONAL_MAP_CHANNELS = 3


def _sem_map_pooled_kernel(u_ref, w_ref, invb_ref, w1_ref, w2_ref, be2_ref,
                           out_ref, m_sc, l_sc, acc_sc):
    """Grid step = (batch block b, spatial block s).

    u_ref/w_ref : (Bt, C, St)        map tiles at their source dtype (cast in-kernel)
    invb_ref    : (Bt, A+Hd, 1) f32  inventory contribution + layer-1 bias
    w1_ref      : (A+Hd, 3*Cg) cdt   fused layer-1 weight (zero cols at group padding)
    w2_ref      : (Hd+1, A+Hd) cdt   fused layer-2 weight (row Hd = attention logits)
    be2_ref     : (Hd, 1) f32        encoder layer-2 bias
    out_ref     : (1, Bt, Hd)        pooled output (written on the last s step)
    m_sc / l_sc : (Bt, 1) f32        online-softmax running max / running sum
    acc_sc      : (Bt, Hd) f32       running sum_s(enc * exp(logit - m))
    """
    f32 = jnp.float32
    cdt = w1_ref.dtype                       # MXU input dtype (bf16 or f32)
    bt, c, st = u_ref.shape
    cg = w1_ref.shape[1] // 3                # channels per (8-aligned) concat group
    hd = be2_ref.shape[0]
    s_idx = pl.program_id(1)
    n_s = pl.num_programs(1)

    @pl.when(s_idx == 0)
    def _():
        m_sc[...] = jnp.full_like(m_sc, -jnp.inf)
        l_sc[...] = jnp.zeros_like(l_sc)
        acc_sc[...] = jnp.zeros_like(acc_sc)

    # Maps are read from HBM once at their source dtype; cast on the fly in-kernel.
    u = u_ref[...].astype(f32)
    w = w_ref[...].astype(f32)
    uw = u * w
    if cg == c:
        x = jnp.concatenate([u, w, uw], axis=1).astype(cdt)             # (Bt, 3C, St)
    else:
        z = jnp.zeros((bt, cg - c, st), f32)                            # aligned pad
        x = jnp.concatenate([u, z, w, z, uw, z], axis=1).astype(cdt)    # (Bt, 3Cg, St)

    # Fused first layer of BOTH branches: one MXU contraction per batch element.
    w1 = jnp.broadcast_to(w1_ref[...], (bt,) + tuple(w1_ref.shape))     # (Bt, A+Hd, 3Cg)
    h = jax.lax.dot_general(w1, x, (((2,), (1,)), ((0,), (0,))),
                            preferred_element_type=f32)                 # (Bt, A+Hd, St)
    h = jnp.maximum(h + invb_ref[...], 0.0)                             # +inv/bias, ReLU

    # Fused second layer: rows 0..Hd-1 = encoder layer-2, row Hd = attention logits
    # (ba2 dropped: softmax is shift-invariant).
    w2 = jnp.broadcast_to(w2_ref[...], (bt,) + tuple(w2_ref.shape))     # (Bt, Hd+1, A+Hd)
    h2 = jax.lax.dot_general(w2, h.astype(cdt), (((2,), (1,)), ((0,), (0,))),
                             preferred_element_type=f32)                # (Bt, Hd+1, St)
    enc = jnp.maximum(h2[:, :hd, :] + be2_ref[...][None, :, :], 0.0)    # (Bt, Hd, St)
    logits = h2[:, hd:hd + 1, :]                                        # (Bt, 1, St)

    # Online softmax + attention-weighted accumulation across spatial blocks.
    m_prev = m_sc[...]                                                  # (Bt, 1)
    m_new = jnp.maximum(m_prev, jnp.max(logits, axis=2))                # lane reduce
    alpha = jnp.exp(m_prev - m_new)                                     # rescale factor
    p = jnp.exp(logits - m_new[:, :, None])                             # (Bt, 1, St)
    l_sc[...] = alpha * l_sc[...] + jnp.sum(p, axis=2)                  # (Bt, 1)
    acc_sc[...] = alpha * acc_sc[...] + jnp.sum(enc * p, axis=2)        # (Bt, Hd)
    m_sc[...] = m_new

    @pl.when(s_idx == n_s - 1)
    def _():
        # mean_s(enc * softmax(logits)) == acc / (sum_p * S); exact division (once
        # per batch block, so the EUP "approx" reciprocal buys nothing here).
        total_s = jnp.float32(st * n_s)
        out_ref[0] = (acc_sc[...] / (l_sc[...] * total_s)).astype(out_ref.dtype)


def semantic_map_with_inventory_encoder_pooled(unshuffle, walkthrough, inventory, params,
                                               n_map_channels, hidden_size, *,
                                               compute_dtype=None,
                                               batch_tile=None, s_tile=None):
    """unshuffle/walkthrough: [B, C, W, H] (NCHW, like PyTorch); inventory: [B, C-3]."""
    B, C, W, H = unshuffle.shape
    assert C == n_map_channels
    S = W * H
    A = hidden_size // 4
    Hd = hidden_size
    f32 = jnp.float32
    if compute_dtype is None:
        # bf16 MXU inputs are native on v6e/v7x (and fine on v5e's MXU); all
        # elementwise math (bias/ReLU/exp/pooling) stays f32 in-kernel.
        compute_dtype = jnp.bfloat16
    cdt = compute_dtype

    # NCHW -> (B, C, S): pure reshape, no cast, no pad -> maps hit HBM exactly once.
    u = unshuffle.reshape(B, C, S)
    w = walkthrough.reshape(B, C, S)
    inv = inventory.astype(f32)

    Cg = -(-C // 8) * 8          # each concat group zero-padded to an 8-sublane boundary

    # Fused layer-1 weights (attention rows first, encoder rows after), split into the
    # map part (contracted against [u, w, u*w] in-kernel) and the inventory part
    # (spatially constant -> folded with b1 into a per-batch bias).
    w1_full = jnp.concatenate([params["wa1"], params["we1"]], axis=0).astype(f32)  # (A+Hd, Cin)
    w1_map_raw = w1_full[:, :3 * C]
    w1_inv = w1_full[:, 3 * C:]
    b1 = jnp.concatenate([params["ba1"], params["be1"]]).astype(f32)
    invb = (inv @ w1_inv.T + b1).reshape(B, A + Hd, 1).astype(f32)

    if Cg == C:
        w1_map = w1_map_raw
    else:
        w1_map = jnp.zeros((A + Hd, 3 * Cg), f32)
        for g in range(3):
            w1_map = w1_map.at[:, g * Cg:g * Cg + C].set(w1_map_raw[:, g * C:(g + 1) * C])
    w1_map = w1_map.astype(cdt)

    # Fused layer-2 weights: rows 0..Hd-1 = [0 | we2] (encoder), row Hd = [wa2 | 0]
    # (attention).  ba2 intentionally dropped (softmax shift invariance).
    w2_fused = jnp.zeros((Hd + 1, A + Hd), f32)
    w2_fused = w2_fused.at[:Hd, A:].set(params["we2"].astype(f32))
    w2_fused = w2_fused.at[Hd, :A].set(params["wa2"].reshape(A).astype(f32))
    w2_fused = w2_fused.astype(cdt)
    be2 = params["be2"].reshape(Hd, 1).astype(f32)

    # ---- tile selection ------------------------------------------------------
    in_bytes = jnp.dtype(unshuffle.dtype).itemsize
    cdt_bytes = jnp.dtype(cdt).itemsize

    def footprint(bt, st):
        # double-buffered u/w input tiles + dominant in-body temporaries
        io = 2 * 2 * bt * C * st * in_bytes
        tmp = bt * st * (3 * Cg * cdt_bytes + (2 * (A + Hd) + 2 * Hd + 2) * 4)
        return io + tmp

    # Conservative per-step budget vs v5e's ~16 MiB default scoped VMEM and v7x's
    # 64 MiB physical per TensorCore (BlockSpec double-buffers every input).
    budget = 6 * 1024 * 1024

    if batch_tile is None:
        cap = 64
        divs = [d for d in range(1, min(B, cap) + 1) if B % d == 0]
        even_n = [d for d in divs if (B // d) % 2 == 0]     # even step count -> 2 TCs
        multi_n = [d for d in divs if (B // d) >= 2]
        Bt = max(even_n or multi_n or divs)
    else:
        Bt = int(batch_tile)
        assert B % Bt == 0, "batch_tile must divide the batch size"

    if s_tile is None:
        St = S
        if footprint(Bt, St) > budget and S % 128 == 0:
            cands = sorted((t for t in range(128, S, 128) if S % t == 0), reverse=True)
            if cands:
                St = next((t for t in cands if footprint(Bt, t) <= budget), cands[-1])
        while footprint(Bt, St) > budget and Bt > 1:        # last resort: shrink Bt
            Bt = max(d for d in range(1, Bt) if B % d == 0)
    else:
        St = int(s_tile)
    assert S % St == 0 and (St == S or St % 128 == 0)
    n_b = B // Bt
    n_s = S // St

    const = lambda b, s: (0, 0)
    out = pl.pallas_call(
        _sem_map_pooled_kernel,
        out_shape=jax.ShapeDtypeStruct((n_b, Bt, Hd), f32),
        grid=(n_b, n_s),
        in_specs=[
            pl.BlockSpec((Bt, C, St), lambda b, s: (b, 0, s)),          # unshuffle
            pl.BlockSpec((Bt, C, St), lambda b, s: (b, 0, s)),          # walkthrough
            pl.BlockSpec((Bt, A + Hd, 1), lambda b, s: (b, 0, 0)),      # inv contrib + b1
            pl.BlockSpec((A + Hd, 3 * Cg), const),                      # fused layer-1 W
            pl.BlockSpec((Hd + 1, A + Hd), const),                      # fused layer-2 W
            pl.BlockSpec((Hd, 1), const),                               # encoder layer-2 b
        ],
        out_specs=pl.BlockSpec((1, Bt, Hd), lambda b, s: (b, 0, 0)),
        scratch_shapes=[pltpu.VMEM((Bt, 1), jnp.float32),               # running max
                        pltpu.VMEM((Bt, 1), jnp.float32),               # running sum_p
                        pltpu.VMEM((Bt, Hd), jnp.float32)],             # running enc*p sum
        compiler_params=pltpu.CompilerParams(
            dimension_semantics=("parallel", "arbitrary"),
            vmem_limit_bytes=32 * 1024 * 1024),
    )(u, w, invb, w1_map, w2_fused, be2)

    return out.reshape(B, Hd)


def _reference(unshuffle, walkthrough, inventory, params):
    """Pure-JAX mirror of the PyTorch forward (NCHW)."""
    B, C, W, H = unshuffle.shape
    inv_b = jnp.broadcast_to(inventory[:, :, None, None].astype(unshuffle.dtype),
                             (B, inventory.shape[1], W, H))
    cat = jnp.concatenate([unshuffle, walkthrough, unshuffle * walkthrough, inv_b], axis=1)
    x = jnp.transpose(cat, (0, 2, 3, 1)).reshape(B, W * H, -1)          # [B, S, Cin]
    ha = jax.nn.relu(x @ params["wa1"].T + params["ba1"])
    logits = ha @ params["wa2"].T + params["ba2"]                       # [B, S, 1]
    probs = jax.nn.softmax(logits.reshape(B, -1), axis=-1).reshape(B, W * H, 1)
    he = jax.nn.relu(x @ params["we1"].T + params["be1"])
    enc = jax.nn.relu(he @ params["we2"].T + params["be2"])             # [B, S, Hd]
    return jnp.mean(enc * probs, axis=1)                                # [B, Hd]


def _init_params(key, n_map_channels, hidden_size):
    cin = 4 * n_map_channels - ADDITIONAL_MAP_CHANNELS
    a = hidden_size // 4
    ks = jax.random.split(key, 8)
    scale = 0.2
    return {
        "we1": scale * jax.random.normal(ks[0], (hidden_size, cin), jnp.float32),
        "be1": scale * jax.random.normal(ks[1], (hidden_size,), jnp.float32),
        "we2": scale * jax.random.normal(ks[2], (hidden_size, hidden_size), jnp.float32),
        "be2": scale * jax.random.normal(ks[3], (hidden_size,), jnp.float32),
        "wa1": scale * jax.random.normal(ks[4], (a, cin), jnp.float32),
        "ba1": scale * jax.random.normal(ks[5], (a,), jnp.float32),
        "wa2": scale * jax.random.normal(ks[6], (1, a), jnp.float32),
        "ba2": scale * jax.random.normal(ks[7], (1,), jnp.float32),
    }


if __name__ == "__main__":
    n_map_channels = 4
    hidden_size = 32
    B, W, H = 2, 16, 16

    key = jax.random.PRNGKey(0)
    k_u, k_w, k_i, k_p = jax.random.split(key, 4)
    unshuffle = jax.random.uniform(k_u, (B, n_map_channels, W, H), jnp.float32)
    walkthrough = jax.random.uniform(k_w, (B, n_map_channels, W, H), jnp.float32)
    inventory = jax.random.uniform(
        k_i, (B, n_map_channels - ADDITIONAL_MAP_CHANNELS), jnp.float32)
    params = _init_params(k_p, n_map_channels, hidden_size)

    ref = jax.block_until_ready(_reference(unshuffle, walkthrough, inventory, params))

    # f32 MXU path (tight check against the reference).
    out = semantic_map_with_inventory_encoder_pooled(
        unshuffle, walkthrough, inventory, params, n_map_channels, hidden_size,
        compute_dtype=jnp.float32)
    out = jax.block_until_ready(out)
    assert out.shape == (B, hidden_size)
    assert jnp.allclose(out, ref, atol=1e-3, rtol=1e-3), (
        f"f32 max abs err {jnp.max(jnp.abs(out - ref))}")

    # Default path: bf16 MXU inputs, f32 accumulation / elementwise.
    out_bf16 = jax.block_until_ready(semantic_map_with_inventory_encoder_pooled(
        unshuffle, walkthrough, inventory, params, n_map_channels, hidden_size))
    assert jnp.max(jnp.abs(out_bf16 - ref)) < 5e-2, (
        f"bf16 max abs err {jnp.max(jnp.abs(out_bf16 - ref))}")

    # Spatial tiling path (online-softmax carries across the S grid axis).
    out_tiled = jax.block_until_ready(semantic_map_with_inventory_encoder_pooled(
        unshuffle, walkthrough, inventory, params, n_map_channels, hidden_size,
        compute_dtype=jnp.float32, s_tile=128))
    assert jnp.allclose(out_tiled, ref, atol=1e-3, rtol=1e-3), (
        f"S-tiled max abs err {jnp.max(jnp.abs(out_tiled - ref))}")

    # Larger batch exercises Bt > 1 with an even number of grid steps (Bt=8, n_b=2).
    B2 = 16
    k_u2, k_w2, k_i2 = jax.random.split(jax.random.PRNGKey(1), 3)
    unshuffle2 = jax.random.uniform(k_u2, (B2, n_map_channels, W, H), jnp.float32)
    walkthrough2 = jax.random.uniform(k_w2, (B2, n_map_channels, W, H), jnp.float32)
    inventory2 = jax.random.uniform(
        k_i2, (B2, n_map_channels - ADDITIONAL_MAP_CHANNELS), jnp.float32)
    out2 = jax.block_until_ready(semantic_map_with_inventory_encoder_pooled(
        unshuffle2, walkthrough2, inventory2, params, n_map_channels, hidden_size,
        compute_dtype=jnp.float32))
    ref2 = jax.block_until_ready(_reference(unshuffle2, walkthrough2, inventory2, params))
    assert jnp.allclose(out2, ref2, atol=1e-3, rtol=1e-3), (
        f"Bt>1 max abs err {jnp.max(jnp.abs(out2 - ref2))}")

    print("KERNEL_OK")
</pallas_src>

<mosaic_0001>
module attributes {stable_mosaic.version = 11 : i64} {
  func.func @_sem_map_pooled_kernel(%arg0: i32, %arg1: i32, %arg2: memref<1x4x256xf32, #tpu.memory_space<vmem>>, %arg3: memref<1x4x256xf32, #tpu.memory_space<vmem>>, %arg4: memref<1x40x1xf32, #tpu.memory_space<vmem>>, %arg5: memref<40x24xf32, #tpu.memory_space<vmem>>, %arg6: memref<33x40xf32, #tpu.memory_space<vmem>>, %arg7: memref<32x1xf32, #tpu.memory_space<vmem>>, %arg8: memref<1x1x32xf32, #tpu.memory_space<vmem>>, %arg9: memref<1x1xf32, #tpu.memory_space<vmem>>, %arg10: memref<1x1xf32, #tpu.memory_space<vmem>>, %arg11: memref<1x32xf32, #tpu.memory_space<vmem>>) attributes {dimension_semantics = [#tpu.dimension_semantics<parallel>, #tpu.dimension_semantics<arbitrary>], iteration_bounds = array<i64: 2, 1>, scalar_prefetch = 0 : i64, scratch_operands = 3 : i64, tpu.core_type = #tpu.core_type<tc>, window_params = [{transform_indices = @transform_0, window_bounds = array<i64: 1, 4, 256>}, {transform_indices = @transform_1, window_bounds = array<i64: 1, 4, 256>}, {transform_indices = @transform_2, window_bounds = array<i64: 1, 40, 1>}, {pipeline_mode = #tpu.pipeline_mode<synchronous>, transform_indices = @transform_3, window_bounds = array<i64: 40, 24>}, {pipeline_mode = #tpu.pipeline_mode<synchronous>, transform_indices = @transform_4, window_bounds = array<i64: 33, 40>}, {pipeline_mode = #tpu.pipeline_mode<synchronous>, transform_indices = @transform_5, window_bounds = array<i64: 32, 1>}, {transform_indices = @transform_6, window_bounds = array<i64: 1, 1, 32>}]} {
    %c0_i32 = arith.constant 0 : i32
    %0 = arith.cmpi eq, %arg1, %c0_i32 : i32
    %1 = arith.extui %0 : i1 to i32
    %c0_i32_0 = arith.constant 0 : i32
    %2 = arith.cmpi ne, %1, %c0_i32_0 : i32
    scf.if %2 {
      %cst_36 = arith.constant 0xFF800000 : f32
      %53 = vector.broadcast %cst_36 : f32 to vector<1x1xf32>
      %c0_37 = arith.constant 0 : index
      %c0_38 = arith.constant 0 : index
      %54 = vector.load %arg9[%c0_37, %c0_38] : memref<1x1xf32, #tpu.memory_space<vmem>>, vector<1x1xf32>
      tpu.vector_store %arg9[%c0_37, %c0_38], %53 {strides = array<i32>} : memref<1x1xf32, #tpu.memory_space<vmem>>, vector<1x1xf32>,
      %cst_39 = arith.constant 0.000000e+00 : f32
      %55 = vector.broadcast %cst_39 : f32 to vector<1x1xf32>
      %c0_40 = arith.constant 0 : index
      %c0_41 = arith.constant 0 : index
      %56 = vector.load %arg10[%c0_40, %c0_41] : memref<1x1xf32, #tpu.memory_space<vmem>>, vector<1x1xf32>
      tpu.vector_store %arg10[%c0_40, %c0_41], %55 {strides = array<i32>} : memref<1x1xf32, #tpu.memory_space<vmem>>, vector<1x1xf32>,
      %cst_42 = arith.constant 0.000000e+00 : f32
      %57 = vector.broadcast %cst_42 : f32 to vector<1x32xf32>
      %c0_43 = arith.constant 0 : index
      %c0_44 = arith.constant 0 : index
      %58 = vector.load %arg11[%c0_43, %c0_44] : memref<1x32xf32, #tpu.memory_space<vmem>>, vector<1x32xf32>
      tpu.vector_store %arg11[%c0_43, %c0_44], %57 {strides = array<i32>} : memref<1x32xf32, #tpu.memory_space<vmem>>, vector<1x32xf32>,
    } else {
    }
    %c0 = arith.constant 0 : index
    %c0_1 = arith.constant 0 : index
    %c0_2 = arith.constant 0 : index
    %3 = vector.load %arg2[%c0, %c0_1, %c0_2] : memref<1x4x256xf32, #tpu.memory_space<vmem>>, vector<1x4x256xf32>
    %c0_3 = arith.constant 0 : index
    %c0_4 = arith.constant 0 : index
    %c0_5 = arith.constant 0 : index
    %4 = vector.load %arg3[%c0_3, %c0_4, %c0_5] : memref<1x4x256xf32, #tpu.memory_space<vmem>>, vector<1x4x256xf32>
    %5 = arith.mulf %3, %4 : vector<1x4x256xf32>
    %cst = arith.constant 0.000000e+00 : f32
    %6 = vector.broadcast %cst : f32 to vector<1x4x256xf32>
    %7 = tpu.concatenate %3, %6, %4, %6, %5, %6 in 1 : vector<1x4x256xf32>, vector<1x4x256xf32>, vector<1x4x256xf32>, vector<1x4x256xf32>, vector<1x4x256xf32>, vector<1x4x256xf32> -> vector<1x24x256xf32>
    %c0_6 = arith.constant 0 : index
    %c0_7 = arith.constant 0 : index
    %8 = vector.load %arg5[%c0_6, %c0_7] : memref<40x24xf32, #tpu.memory_space<vmem>>, vector<40x24xf32>
    %9 = vector.shape_cast %8 : vector<40x24xf32> to vector<1x40x24xf32>
    %cst_8 = arith.constant dense<0.000000e+00> : vector<1x40x256xf32>
    %10 = tpu.matmul %9, %7, %cst_8 {dimension_numbers = #tpu.dot_dimension_numbers<[2], [1], [1], [2], [0, 0, 0, 1, 1, 2], [0], [0]>} : vector<1x40x24xf32>, vector<1x24x256xf32>, vector<1x40x256xf32> -> vector<1x40x256xf32>
    %c0_9 = arith.constant 0 : index
    %c0_10 = arith.constant 0 : index
    %c0_11 = arith.constant 0 : index
    %11 = vector.load %arg4[%c0_9, %c0_10, %c0_11] : memref<1x40x1xf32, #tpu.memory_space<vmem>>, vector<1x40x1xf32>
    %12 = vector.broadcast %11 : vector<1x40x1xf32> to vector<1x40x256xf32>
    %13 = arith.addf %10, %12 : vector<1x40x256xf32>
    %cst_12 = arith.constant 0.000000e+00 : f32
    %14 = vector.broadcast %cst_12 : f32 to vector<1x40x256xf32>
    %15 = arith.maximumf %13, %14 : vector<1x40x256xf32>
    %c0_13 = arith.constant 0 : index
    %c0_14 = arith.constant 0 : index
    %16 = vector.load %arg6[%c0_13, %c0_14] : memref<33x40xf32, #tpu.memory_space<vmem>>, vector<33x40xf32>
    %17 = vector.shape_cast %16 : vector<33x40xf32> to vector<1x33x40xf32>
    %cst_15 = arith.constant dense<0.000000e+00> : vector<1x33x256xf32>
    %18 = tpu.matmul %17, %15, %cst_15 {dimension_numbers = #tpu.dot_dimension_numbers<[2], [1], [1], [2], [0, 0, 0, 1, 1, 2], [0], [0]>} : vector<1x33x40xf32>, vector<1x40x256xf32>, vector<1x33x256xf32> -> vector<1x33x256xf32>
    %19 = vector.extract_strided_slice %18 {offsets = [0, 0, 0], sizes = [1, 32, 256], strides = [1, 1, 1]} : vector<1x33x256xf32> to vector<1x32x256xf32>
    %c0_16 = arith.constant 0 : index
    %c0_17 = arith.constant 0 : index
    %20 = vector.load %arg7[%c0_16, %c0_17] : memref<32x1xf32, #tpu.memory_space<vmem>>, vector<32x1xf32>
    %21 = vector.shape_cast %20 : vector<32x1xf32> to vector<1x32x1xf32>
    %22 = vector.broadcast %21 : vector<1x32x1xf32> to vector<1x32x256xf32>
    %23 = arith.addf %19, %22 : vector<1x32x256xf32>
    %cst_18 = arith.constant 0.000000e+00 : f32
    %24 = vector.broadcast %cst_18 : f32 to vector<1x32x256xf32>
    %25 = arith.maximumf %23, %24 : vector<1x32x256xf32>
    %26 = vector.extract_strided_slice %18 {offsets = [0, 32, 0], sizes = [1, 1, 256], strides = [1, 1, 1]} : vector<1x33x256xf32> to vector<1x1x256xf32>
    %c0_19 = arith.constant 0 : index
    %c0_20 = arith.constant 0 : index
    %27 = vector.load %arg9[%c0_19, %c0_20] : memref<1x1xf32, #tpu.memory_space<vmem>>, vector<1x1xf32>
    %cst_21 = arith.constant dense<0xFF800000> : vector<1x1xf32>
    %28 = vector.multi_reduction <maximumf>, %26, %cst_21 [2] : vector<1x1x256xf32> to vector<1x1xf32>
    %29 = arith.maximumf %27, %28 : vector<1x1xf32>
    %30 = arith.subf %27, %29 : vector<1x1xf32>
    %31 = math.exp %30 : vector<1x1xf32>
    %32 = vector.shape_cast %29 : vector<1x1xf32> to vector<1x1x1xf32>
    %33 = vector.broadcast %32 : vector<1x1x1xf32> to vector<1x1x256xf32>
    %34 = arith.subf %26, %33 : vector<1x1x256xf32>
    %35 = math.exp %34 : vector<1x1x256xf32>
    %c0_22 = arith.constant 0 : index
    %c0_23 = arith.constant 0 : index
    %36 = vector.load %arg10[%c0_22, %c0_23] : memref<1x1xf32, #tpu.memory_space<vmem>>, vector<1x1xf32>
    %37 = arith.mulf %31, %36 : vector<1x1xf32>
    %cst_24 = arith.constant dense<0.000000e+00> : vector<1x1xf32>
    %38 = vector.multi_reduction <add>, %35, %cst_24 [2] : vector<1x1x256xf32> to vector<1x1xf32>
    %39 = arith.addf %37, %38 : vector<1x1xf32>
    %c0_25 = arith.constant 0 : index
    %c0_26 = arith.constant 0 : index
    %40 = vector.load %arg10[%c0_25, %c0_26] : memref<1x1xf32, #tpu.memory_space<vmem>>, vector<1x1xf32>
    tpu.vector_store %arg10[%c0_25, %c0_26], %39 {strides = array<i32>} : memref<1x1xf32, #tpu.memory_space<vmem>>, vector<1x1xf32>,
    %c0_27 = arith.constant 0 : index
    %c0_28 = arith.constant 0 : index
    %41 = vector.load %arg11[%c0_27, %c0_28] : memref<1x32xf32, #tpu.memory_space<vmem>>, vector<1x32xf32>
    %42 = vector.broadcast %31 : vector<1x1xf32> to vector<1x32xf32>
    %43 = arith.mulf %42, %41 : vector<1x32xf32>
    %44 = vector.broadcast %35 : vector<1x1x256xf32> to vector<1x32x256xf32>
    %45 = arith.mulf %25, %44 : vector<1x32x256xf32>
    %cst_29 = arith.constant dense<0.000000e+00> : vector<1x32xf32>
    %46 = vector.multi_reduction <add>, %45, %cst_29 [2] : vector<1x32x256xf32> to vector<1x32xf32>
    %47 = arith.addf %43, %46 : vector<1x32xf32>
    %c0_30 = arith.constant 0 : index
    %c0_31 = arith.constant 0 : index
    %48 = vector.load %arg11[%c0_30, %c0_31] : memref<1x32xf32, #tpu.memory_space<vmem>>, vector<1x32xf32>
    tpu.vector_store %arg11[%c0_30, %c0_31], %47 {strides = array<i32>} : memref<1x32xf32, #tpu.memory_space<vmem>>, vector<1x32xf32>,
    %c0_32 = arith.constant 0 : index
    %c0_33 = arith.constant 0 : index
    %49 = vector.load %arg9[%c0_32, %c0_33] : memref<1x1xf32, #tpu.memory_space<vmem>>, vector<1x1xf32>
    tpu.vector_store %arg9[%c0_32, %c0_33], %29 {strides = array<i32>} : memref<1x1xf32, #tpu.memory_space<vmem>>, vector<1x1xf32>,
    %c0_i32_34 = arith.constant 0 : i32
    %50 = arith.cmpi eq, %arg1, %c0_i32_34 : i32
    %51 = arith.extui %50 : i1 to i32
    %c0_i32_35 = arith.constant 0 : i32
    %52 = arith.cmpi ne, %51, %c0_i32_35 : i32
    scf.if %52 {
      %c0_36 = arith.constant 0 : index
      %c0_37 = arith.constant 0 : index
      %53 = vector.load %arg11[%c0_36, %c0_37] : memref<1x32xf32, #tpu.memory_space<vmem>>, vector<1x32xf32>
      %c0_38 = arith.constant 0 : index
      %c0_39 = arith.constant 0 : index
      %54 = vector.load %arg10[%c0_38, %c0_39] : memref<1x1xf32, #tpu.memory_space<vmem>>, vector<1x1xf32>
      %cst_40 = arith.constant 2.560000e+02 : f32
      %55 = vector.broadcast %cst_40 : f32 to vector<1x1xf32>
      %56 = arith.mulf %54, %55 : vector<1x1xf32>
      %57 = vector.broadcast %56 : vector<1x1xf32> to vector<1x32xf32>
      %58 = arith.divf %53, %57 : vector<1x32xf32>
      %c0_41 = arith.constant 0 : index
      %c0_42 = arith.constant 0 : index
      %c0_43 = arith.constant 0 : index
      %59 = vector.load %arg8[%c0_41, %c0_42, %c0_43] : memref<1x1x32xf32, #tpu.memory_space<vmem>>, vector<1x1x32xf32>
      %60 = vector.shape_cast %59 : vector<1x1x32xf32> to vector<1x32xf32>
      %61 = vector.shape_cast %58 : vector<1x32xf32> to vector<1x1x32xf32>
      tpu.vector_store %arg8[%c0_41, %c0_42, %c0_43], %61 {strides = array<i32>} : memref<1x1x32xf32, #tpu.memory_space<vmem>>, vector<1x1x32xf32>,
    } else {
    }
    return
  }
  func.func @transform_0(%arg0: i32, %arg1: i32) -> (i32, i32, i32) {
    %c0_i32 = arith.constant 0 : i32
    %c0_i32_0 = arith.constant 0 : i32
    return %arg0, %c0_i32, %arg1 : i32, i32, i32
  }
  func.func @transform_1(%arg0: i32, %arg1: i32) -> (i32, i32, i32) {
    %c0_i32 = arith.constant 0 : i32
    %c0_i32_0 = arith.constant 0 : i32
    return %arg0, %c0_i32, %arg1 : i32, i32, i32
  }
  func.func @transform_2(%arg0: i32, %arg1: i32) -> (i32, i32, i32) {
    %c0_i32 = arith.constant 0 : i32
    %c0_i32_0 = arith.constant 0 : i32
    %c0_i32_1 = arith.constant 0 : i32
    return %arg0, %c0_i32, %c0_i32_0 : i32, i32, i32
  }
  func.func @transform_3(%arg0: i32, %arg1: i32) -> (i32, i32) {
    %c0_i32 = arith.constant 0 : i32
    %c0_i32_0 = arith.constant 0 : i32
    %c0_i32_1 = arith.constant 0 : i32
    return %c0_i32, %c0_i32_0 : i32, i32
  }
  func.func @transform_4(%arg0: i32, %arg1: i32) -> (i32, i32) {
    %c0_i32 = arith.constant 0 : i32
    %c0_i32_0 = arith.constant 0 : i32
    %c0_i32_1 = arith.constant 0 : i32
    return %c0_i32, %c0_i32_0 : i32, i32
  }
  func.func @transform_5(%arg0: i32, %arg1: i32) -> (i32, i32) {
    %c0_i32 = arith.constant 0 : i32
    %c0_i32_0 = arith.constant 0 : i32
    %c0_i32_1 = arith.constant 0 : i32
    return %c0_i32, %c0_i32_0 : i32, i32
  }
  func.func @transform_6(%arg0: i32, %arg1: i32) -> (i32, i32, i32) {
    %c0_i32 = arith.constant 0 : i32
    %c0_i32_0 = arith.constant 0 : i32
    %c0_i32_1 = arith.constant 0 : i32
    return %arg0, %c0_i32, %c0_i32_0 : i32, i32, i32
  }
}

</mosaic_0001>

<llo_original>
// kernel: tpu_custom_call.1
$region0: #{tpu_custom_call.1}
  #allocation0 [shape = 'u32[]', space=smem, size = 0x4, offset = 0x4, fixed_abs, tag = 'smem constant byte address 0x4 - core index']
  #allocation1 [shape = 'u32[72,128]{1,0:T(1,128)}', space=vmem, size = 0x9000, scoped, tag = 'internal scratch']
  #allocation2 [shape = 'f32[1,1]{1,0:T(1,128)}', space=vmem, size = 0x200, scoped, tag = 'scratch operand']
  #allocation3 [shape = 'f32[1,1]{1,0:T(1,128)}', space=vmem, size = 0x200, scoped, tag = 'scratch operand']
  #allocation4 [shape = 'f32[1,32]{1,0:T(1,128)}', space=vmem, size = 0x200, scoped, tag = 'scratch operand']
  %s0 = inlined_call_operand.vmem [shape: f32[2,4,256], index: 0, kind: input, shape index: {}]
  %s1 = inlined_call_operand.vmem [shape: f32[2,4,256], index: 1, kind: input, shape index: {}]
  %s2 = inlined_call_operand.vmem [shape: f32[2,40,1], index: 2, kind: input, shape index: {}]
  %s3 = inlined_call_operand.vmem [shape: f32[40,24], index: 3, kind: input, shape index: {}]
  %s4 = inlined_call_operand.vmem [shape: f32[33,40], index: 4, kind: input, shape index: {}]
  %s5 = inlined_call_operand.vmem [shape: f32[32,1], index: 5, kind: input, shape index: {}]
  %s6 = inlined_call_operand.hbm [shape: f32[2,1,32], index: 6, kind: output, shape index: {}]
  %s7 = sld [smem:[#allocation0]]
  $region65: #{tpu_custom_call.1} parent=0
    _
  %s9 = ssub.s32 1, %s7
  %s10 = scalar_select 0, %s9, %s7
  $region1: #{tpu_custom_call.1} parent=0
    #allocation5 [shape = 'u8[1024]{0}', space=vmem, size = 0x400, scoped, tag = 'output window, operand 0']
    #allocation6 [shape = 's32[2]{0}', space=sflag, size = 0x8, scoped, tag = 'scoped memory for tpu_custom_call.1']
    %11 = vsyncpa [#allocation6], 0
    %s12 = scalar_lea.sflag [#allocation6], 1
    %13 = vsyncpa %s12, 0
    loop: start=0, step=1, limit=4
    $region2: #{tpu_custom_call.1} parent=1 // loop_pre_header
      _
    $region3: #{tpu_custom_call.1} parent=1 // loop_header
      %s15 = sphi 0, %s19
      %p16 = scmp.ge.s32.totalorder %s15, 4
      %s22 = sphi 0, %s34
      %s23 = sphi 0, %s30
      %s24 = sphi 0, %s22
      %s25 = sphi 0, %s23
      %s26 = sphi 0, %s24
      %s27 = sphi 0, %s25
      %s39 = sphi 0, %s41
      %s42 = sphi 0, %s39
      %s43 = sphi 0, %s42
      %s59 = sphi 0, %s43
      %s67 = sphi 0, %s69
      %s70 = sphi 0, %s67
      %s71 = sphi 0, %s70
      %s87 = sphi 0, %s71
      %s93 = sphi 0, %s95
      %s96 = sphi 0, %s93
      %s97 = sphi 0, %s96
      %s113 = sphi 0, %s97
      %s117 = sphi 0, %s117
      %s119 = sphi 0, %s117
      %s120 = sphi 0, %s119
      %s134 = sphi 0, %s120
      %s138 = sphi 0, %s138
      %s140 = sphi 0, %s138
      %s141 = sphi 0, %s140
      %s155 = sphi 0, %s141
      %s159 = sphi 0, %s159
      %s161 = sphi 0, %s159
      %s162 = sphi 0, %s161
      %s176 = sphi 0, %s162
      %s182 = sphi 0, %s184
      %s185 = sphi 0, %s182
      %s186 = sphi 0, %s185
      %s202 = sphi 0, %s186
    $region4: #{tpu_custom_call.1} parent=1 // loop_header_branch
      %18 = sbr.rel (%p16) target = $region8
    $region5: #{tpu_custom_call.1} parent=1 // loop_body
      %s20 = ssub.s32 %s15, 1
      %s21 = ssub.s32 %s15, 2
      %s28 = sadd.s32 1, %s23
      %p29 = scmp.ge.s32.totalorder %s28, 1
      %s30 = scalar_select %p29, 0, %s28
      %s31 = sadd.s32 1, %s22
      %s32 = scalar_select %p29, %s31, %s22
      %p33 = scmp.ge.s32.totalorder %s32, 2
      %s34 = scalar_select %p33, 0, %s32
      %s35 = ssub.s32 %s22, %s34
      %s36 = ssub.s32 %s23, %s30
      %s37 = sor.u32 %s35, %s36
      %p38 = scmp.eq.s32.totalorder %s37, 0
      %s40 = sadd.s32 %s39, 1
      %s41 = scalar_select %p38, %s39, %s40
      %p44 = pneg %p38
      %p45 = scmp.eq.s32.totalorder %s15, 1
      %p46 = por %p44, %p45
      %p47 = scmp.ne.s32.totalorder %s39, %s42
      %p48 = scmp.eq.s32.totalorder %s15, 0
      %p49 = por %p47, %p48
      %p50 = scmp.ne.s32.totalorder %s39, %s42
      %p51 = scmp.eq.s32.totalorder %s20, 1
      %p52 = por %p50, %p51
      %p53 = scmp.ne.s32.totalorder %s42, %s43
      %p54 = scmp.eq.s32.totalorder %s20, 0
      %p55 = por %p53, %p54
      %p56 = scmp.ne.s32.totalorder %s42, %s43
      %p57 = scmp.eq.s32.totalorder %s21, 1
      %p58 = por %p56, %p57
      %p60 = scmp.ne.s32.totalorder %s43, %s59
      %p61 = scmp.eq.s32.totalorder %s21, 0
      %p62 = por %p60, %p61
      %s63 = ssub.s32 %s22, %s34
      %s64 = ssub.s32 %s23, %s30
      %s65 = sor.u32 %s63, %s64
      %p66 = scmp.eq.s32.totalorder %s65, 0
      %s68 = sadd.s32 %s67, 1
      %s69 = scalar_select %p66, %s67, %s68
      %p72 = pneg %p66
      %p73 = scmp.eq.s32.totalorder %s15, 1
      %p74 = por %p72, %p73
      %p75 = scmp.ne.s32.totalorder %s67, %s70
      %p76 = scmp.eq.s32.totalorder %s15, 0
      %p77 = por %p75, %p76
      %p78 = scmp.ne.s32.totalorder %s67, %s70
      %p79 = scmp.eq.s32.totalorder %s20, 1
      %p80 = por %p78, %p79
      %p81 = scmp.ne.s32.totalorder %s70, %s71
      %p82 = scmp.eq.s32.totalorder %s20, 0
      %p83 = por %p81, %p82
      %p84 = scmp.ne.s32.totalorder %s70, %s71
      %p85 = scmp.eq.s32.totalorder %s21, 1
      %p86 = por %p84, %p85
      %p88 = scmp.ne.s32.totalorder %s71, %s87
      %p89 = scmp.eq.s32.totalorder %s21, 0
      %p90 = por %p88, %p89
      %s91 = ssub.s32 %s22, %s34
      %p92 = scmp.eq.s32.totalorder %s91, 0
      %s94 = sadd.s32 %s93, 1
      %s95 = scalar_select %p92, %s93, %s94
      %p98 = pneg %p92
      %p99 = scmp.eq.s32.totalorder %s15, 1
      %p100 = por %p98, %p99
      %p101 = scmp.ne.s32.totalorder %s93, %s96
      %p102 = scmp.eq.s32.totalorder %s15, 0
      %p103 = por %p101, %p102
      %p104 = scmp.ne.s32.totalorder %s93, %s96
      %p105 = scmp.eq.s32.totalorder %s20, 1
      %p106 = por %p104, %p105
      %p107 = scmp.ne.s32.totalorder %s96, %s97
      %p108 = scmp.eq.s32.totalorder %s20, 0
      %p109 = por %p107, %p108
      %p110 = scmp.ne.s32.totalorder %s96, %s97
      %p111 = scmp.eq.s32.totalorder %s21, 1
      %p112 = por %p110, %p111
      %p114 = scmp.ne.s32.totalorder %s97, %s113
      %p115 = scmp.eq.s32.totalorder %s21, 0
      %p116 = por %p114, %p115
      %s118 = sadd.s32 %s117, 1
      %p121 = scmp.eq.s32.totalorder %s15, 1
      %p122 = scmp.ne.s32.totalorder %s117, %s119
      %p123 = scmp.eq.s32.totalorder %s15, 0
      %p124 = por %p122, %p123
      %p125 = scmp.ne.s32.totalorder %s117, %s119
      %p126 = scmp.eq.s32.totalorder %s20, 1
      %p127 = por %p125, %p126
      %p128 = scmp.ne.s32.totalorder %s119, %s120
      %p129 = scmp.eq.s32.totalorder %s20, 0
      %p130 = por %p128, %p129
      %p131 = scmp.ne.s32.totalorder %s119, %s120
      %p132 = scmp.eq.s32.totalorder %s21, 1
      %p133 = por %p131, %p132
      %p135 = scmp.ne.s32.totalorder %s120, %s134
      %p136 = scmp.eq.s32.totalorder %s21, 0
      %p137 = por %p135, %p136
      %s139 = sadd.s32 %s138, 1
      %p142 = scmp.eq.s32.totalorder %s15, 1
      %p143 = scmp.ne.s32.totalorder %s138, %s140
      %p144 = scmp.eq.s32.totalorder %s15, 0
      %p145 = por %p143, %p144
      %p146 = scmp.ne.s32.totalorder %s138, %s140
      %p147 = scmp.eq.s32.totalorder %s20, 1
      %p148 = por %p146, %p147
      %p149 = scmp.ne.s32.totalorder %s140, %s141
      %p150 = scmp.eq.s32.totalorder %s20, 0
      %p151 = por %p149, %p150
      %p152 = scmp.ne.s32.totalorder %s140, %s141
      %p153 = scmp.eq.s32.totalorder %s21, 1
      %p154 = por %p152, %p153
      %p156 = scmp.ne.s32.totalorder %s141, %s155
      %p157 = scmp.eq.s32.totalorder %s21, 0
      %p158 = por %p156, %p157
      %s160 = sadd.s32 %s159, 1
      %p163 = scmp.eq.s32.totalorder %s15, 1
      %p164 = scmp.ne.s32.totalorder %s159, %s161
      %p165 = scmp.eq.s32.totalorder %s15, 0
      %p166 = por %p164, %p165
      %p167 = scmp.ne.s32.totalorder %s159, %s161
      %p168 = scmp.eq.s32.totalorder %s20, 1
      %p169 = por %p167, %p168
      %p170 = scmp.ne.s32.totalorder %s161, %s162
      %p171 = scmp.eq.s32.totalorder %s20, 0
      %p172 = por %p170, %p171
      %p173 = scmp.ne.s32.totalorder %s161, %s162
      %p174 = scmp.eq.s32.totalorder %s21, 1
      %p175 = por %p173, %p174
      %p177 = scmp.ne.s32.totalorder %s162, %s176
      %p178 = scmp.eq.s32.totalorder %s21, 0
      %p179 = por %p177, %p178
      %s180 = ssub.s32 %s22, %s34
      %p181 = scmp.eq.s32.totalorder %s180, 0
      %s183 = sadd.s32 %s182, 1
      %s184 = scalar_select %p181, %s182, %s183
      %p187 = pneg %p181
      %p188 = scmp.eq.s32.totalorder %s15, 1
      %p189 = por %p187, %p188
      %p190 = scmp.ne.s32.totalorder %s182, %s185
      %p191 = scmp.eq.s32.totalorder %s15, 0
      %p192 = por %p190, %p191
      %p193 = scmp.ne.s32.totalorder %s182, %s185
      %p194 = scmp.eq.s32.totalorder %s20, 1
      %p195 = por %p193, %p194
      %p196 = scmp.ne.s32.totalorder %s185, %s186
      %p197 = scmp.eq.s32.totalorder %s20, 0
      %p198 = por %p196, %p197
      %p199 = scmp.ne.s32.totalorder %s185, %s186
      %p200 = scmp.eq.s32.totalorder %s21, 1
      %p201 = por %p199, %p200
      %p203 = scmp.ne.s32.totalorder %s186, %s202
      %p204 = scmp.eq.s32.totalorder %s21, 0
      %p205 = por %p203, %p204
      %p206 = scmp.le.s32.totalorder 1, %s15
      %p207 = scmp.lt.s32.totalorder %s15, 3
      %p208 = pnand %p206, %p207
      %p209 = pneg %p208
      // Predicated region
      $region9: #{tpu_custom_call.1} parent=5 // pred_check
        _
      $region10: #{tpu_custom_call.1} parent=5 // pred_check_branch
        %211 = sbr.rel (%p208) target = $region12
      $region11: #{tpu_custom_call.1} parent=5 // pred_region
        %s212 = ssub.s32 %s15, 1
        // Predicated region
        $region13: #{tpu_custom_call.1} parent=11 // pred_check
          %p213 = pneg %p130
        $region14: #{tpu_custom_call.1} parent=11 // pred_check_branch
          %215 = sbr.rel (%p213) target = $region16
        $region15: #{tpu_custom_call.1} parent=11 // pred_region
          _
        $region16: #{tpu_custom_call.1} parent=11 // pred_fallthru
          _
        // Predicated region
        $region17: #{tpu_custom_call.1} parent=11 // pred_check
          %p216 = pneg %p151
        $region18: #{tpu_custom_call.1} parent=11 // pred_check_branch
          %218 = sbr.rel (%p216) target = $region20
        $region19: #{tpu_custom_call.1} parent=11 // pred_region
          _
        $region20: #{tpu_custom_call.1} parent=11 // pred_fallthru
          _
        // Predicated region
        $region21: #{tpu_custom_call.1} parent=11 // pred_check
          %p219 = pneg %p172
        $region22: #{tpu_custom_call.1} parent=11 // pred_check_branch
          %221 = sbr.rel (%p219) target = $region24
        $region23: #{tpu_custom_call.1} parent=11 // pred_region
          _
        $region24: #{tpu_custom_call.1} parent=11 // pred_fallthru
          _
      $region12: #{tpu_custom_call.1} parent=5 // pred_fallthru
        _
      %p222 = scmp.lt.s32.totalorder %s15, 2
      // Predicated region
      $region25: #{tpu_custom_call.1} parent=5 // pred_check
        %p223 = pneg %p222
      $region26: #{tpu_custom_call.1} parent=5 // pred_check_branch
        %225 = sbr.rel (%p223) target = $region28
      $region27: #{tpu_custom_call.1} parent=5 // pred_region
        // Predicated region
        $region29: #{tpu_custom_call.1} parent=27 // pred_check
          %p226 = pneg %p49
        $region30: #{tpu_custom_call.1} parent=27 // pred_check_branch
          %228 = sbr.rel (%p226) target = $region32
        $region31: #{tpu_custom_call.1} parent=27 // pred_region
          %s229 = smul.u32 2, %s23
          %p230 = scmp.lt.s32.totalorder %s22, 1
          %s231 = scalar_select %p230, %s22, 1
          %p232 = scmp.lt.s32.totalorder %s229, 1
          %s233 = scalar_select %p232, %s229, 1
          %s234 = smul.addr %s231, 2
          %s235 = sadd.s32 %s233, %s234
          %s236 = smul.addr %s235, 4
          %s237 = scalar_lea.vmem %s0, %s236
          %s238 = smul.u32 2, %s23
        $region32: #{tpu_custom_call.1} parent=27 // pred_fallthru
          _
        // Predicated region
        $region33: #{tpu_custom_call.1} parent=27 // pred_check
          %p239 = pneg %p77
        $region34: #{tpu_custom_call.1} parent=27 // pred_check_branch
          %241 = sbr.rel (%p239) target = $region36
        $region35: #{tpu_custom_call.1} parent=27 // pred_region
          %s242 = smul.u32 2, %s23
          %p243 = scmp.lt.s32.totalorder %s22, 1
          %s244 = scalar_select %p243, %s22, 1
          %p245 = scmp.lt.s32.totalorder %s242, 1
          %s246 = scalar_select %p245, %s242, 1
          %s247 = smul.addr %s244, 2
          %s248 = sadd.s32 %s246, %s247
          %s249 = smul.addr %s248, 4
          %s250 = scalar_lea.vmem %s1, %s249
          %s251 = smul.u32 2, %s23
        $region36: #{tpu_custom_call.1} parent=27 // pred_fallthru
          _
        // Predicated region
        $region37: #{tpu_custom_call.1} parent=27 // pred_check
          %p252 = pneg %p103
        $region38: #{tpu_custom_call.1} parent=27 // pred_check_branch
          %254 = sbr.rel (%p252) target = $region40
        $region39: #{tpu_custom_call.1} parent=27 // pred_region
          %p255 = scmp.lt.s32.totalorder %s22, 1
          %s256 = scalar_select %p255, %s22, 1
          %s257 = smul.addr %s256, 5
          %s258 = smul.addr %s257, 8
          %s259 = scalar_lea.vmem %s2, %s258
        $region40: #{tpu_custom_call.1} parent=27 // pred_fallthru
          _
      $region28: #{tpu_custom_call.1} parent=5 // pred_fallthru
        _
      %p260 = scmp.le.s32.totalorder 1, %s15
      %p261 = scmp.lt.s32.totalorder %s15, 3
      %p262 = pnand %p260, %p261
      %p263 = pneg %p262
      // Predicated region
      $region41: #{tpu_custom_call.1} parent=5 // pred_check
        _
      $region42: #{tpu_custom_call.1} parent=5 // pred_check_branch
        %265 = sbr.rel (%p262) target = $region44
      $region43: #{tpu_custom_call.1} parent=5 // pred_region
        %s266 = ssub.s32 %s15, 1
        %s267 = smul.u32 2, %s25
        %p268 = scmp.lt.s32.totalorder %s24, 1
        %s269 = scalar_select %p268, %s24, 1
        %p270 = scmp.lt.s32.totalorder %s267, 1
        %s271 = scalar_select %p270, %s267, 1
        %s272 = smul.addr %s269, 2
        %s273 = sadd.s32 %s271, %s272
        %s274 = smul.addr %s273, 4
        %s275 = scalar_lea.vmem %s0, %s274
        %p276 = pneg %p55
        %p277 = pneg %p52
        %s278 = smul.u32 2, %s25
        %p279 = scmp.lt.s32.totalorder %s24, 1
        %s280 = scalar_select %p279, %s24, 1
        %p281 = scmp.lt.s32.totalorder %s278, 1
        %s282 = scalar_select %p281, %s278, 1
        %s283 = smul.addr %s280, 2
        %s284 = sadd.s32 %s282, %s283
        %s285 = smul.addr %s284, 4
        %s286 = scalar_lea.vmem %s1, %s285
        %p287 = pneg %p83
        %p288 = pneg %p80
        %p289 = scmp.lt.s32.totalorder %s24, 1
        %s290 = scalar_select %p289, %s24, 1
        %s291 = smul.addr %s290, 5
        %s292 = smul.addr %s291, 8
        %s293 = scalar_lea.vmem %s2, %s292
        %p294 = pneg %p109
        %p295 = pneg %p106
        %p296 = pneg %p130
        %p297 = pneg %p127
        %p298 = pneg %p151
        %p299 = pneg %p148
        %p300 = pneg %p172
        %p301 = pneg %p169
        %p302 = pneg %p198
        %p303 = pneg %p195
        %s304 = sand.u32 %s185, 1
        %s305 = scalar_lea.sflag [#allocation6], %s304
        %s306 = sand.u32 %s185, 1
        %s307 = scalar_lea.vmem [#allocation5], %s306
        %s308 = smul.u32 2, %s25
        %p309 = scmp.lt.s32.totalorder %s24, 1
        %s310 = scalar_select %p309, %s24, 1
        %p311 = scmp.lt.s32.totalorder %s308, 1
        %s312 = scalar_select %p311, %s308, 1
        %s313 = smul.addr %s310, 2
        %s314 = sadd.s32 %s312, %s313
        %s315 = smul.addr %s314, 4
        %s316 = scalar_lea.vmem %s0, %s315
        %s317 = smul.u32 2, %s25
        %s318 = smul.u32 2, %s25
        %p319 = scmp.lt.s32.totalorder %s24, 1
        %s320 = scalar_select %p319, %s24, 1
        %p321 = scmp.lt.s32.totalorder %s318, 1
        %s322 = scalar_select %p321, %s318, 1
        %s323 = smul.addr %s320, 2
        %s324 = sadd.s32 %s322, %s323
        %s325 = smul.addr %s324, 4
        %s326 = scalar_lea.vmem %s1, %s325
        %s327 = smul.u32 2, %s25
        %p328 = scmp.lt.s32.totalorder %s24, 1
        %s329 = scalar_select %p328, %s24, 1
        %s330 = smul.addr %s329, 5
        %s331 = smul.addr %s330, 8
        %s332 = scalar_lea.vmem %s2, %s331
        %p333 = scmp.eq.s32.totalorder %s25, 0
        // Predicated region
        $region45: #{tpu_custom_call.1} parent=43 // pred_check
          %p334 = pneg %p333
        $region46: #{tpu_custom_call.1} parent=43 // pred_check_branch
          %336 = sbr.rel (%p334) target = $region48
        $region47: #{tpu_custom_call.1} parent=43 // pred_region
          %vm337 = vcmask 0
          %338 = vst.msk [vmem:[#allocation2] sm:$0x1] %vm337, -inf
          %339 = vst.msk [vmem:[#allocation3] sm:$0x1] %vm337, 0.0
          %vm340 = vcmask 253952
          %341 = vst.msk [vmem:[#allocation4] sm:$0x1] %vm340, 0.0
        $region48: #{tpu_custom_call.1} parent=43 // pred_fallthru
          _
        %v342 = vld [vmem:[%s316] sm:$0xff]
        %v343 = vld [vmem:[%s326] sm:$0xff]
        %v344 = vmul.f32 %v342, %v343
        %346 = vst [vmem:[#allocation1] ss:$2 sm:$0xff] %v342
        %v347 = vld.sshfl [vmem:[#allocation1] sm:$0xff pattern:$0x75316420]
        %v348 = vld.sshfl [vmem:[#allocation1 + $0x8] sm:$0xff pattern:$0x75316420]
        %352 = vst [vmem:[#allocation1] ss:$2 sm:$0xff] %v343
        %v353 = vld.sshfl [vmem:[#allocation1] sm:$0xff pattern:$0x75316420]
        %v354 = vld.sshfl [vmem:[#allocation1 + $0x8] sm:$0xff pattern:$0x75316420]
        %358 = vst [vmem:[#allocation1] ss:$2 sm:$0xff] %v344
        %v359 = vld.sshfl [vmem:[#allocation1] sm:$0xff pattern:$0x75316420]
        %v360 = vld.sshfl [vmem:[#allocation1 + $0x8] sm:$0xff pattern:$0x75316420]
        %vm363 = vcmask 1043456
        %v364 = vsel %vm363, %v347, 0.0
        %v365 = vsel %vm363, %v348, 0.0
        %v366 = vsel %vm363, %v353, 0.0
        %v367 = vsel %vm363, %v354, 0.0
        %v368 = vsel %vm363, %v359, 0.0
        %v369 = vsel %vm363, %v360, 0.0
        %v370 = vld [vmem:[%s3] sm:$0xff]
        %v371 = vld [vmem:[%s3 + $0x8] sm:$0xff]
        %v372 = vld [vmem:[%s3 + $0x10] sm:$0xff]
        %v373 = vld [vmem:[%s3 + $0x18] sm:$0xff]
        %v374 = vld [vmem:[%s3 + $0x20] sm:$0xff]
        %v375 = vld [vmem:[%s332] sm:$0xff]
        %v376 = vld [vmem:[%s332 + $0x8] sm:$0xff]
        %v377 = vld [vmem:[%s332 + $0x10] sm:$0xff]
        %v378 = vld [vmem:[%s332 + $0x18] sm:$0xff]
        %v379 = vld [vmem:[%s332 + $0x20] sm:$0xff]
        %381 = vset.pattern.permute.xlu0 0
        %382 = vperm.xlu0 %381, %v375
        %v383 = vpop.permute.xlu0 %382
        %386 = vset.pattern.permute.xlu0 0
        %387 = vperm.xlu0 %386, %v376
        %v388 = vpop.permute.xlu0 %387
        %391 = vset.pattern.permute.xlu0 0
        %392 = vperm.xlu0 %391, %v377
        %v393 = vpop.permute.xlu0 %392
        %396 = vset.pattern.permute.xlu0 0
        %397 = vperm.xlu0 %396, %v378
        %v398 = vpop.permute.xlu0 %397
        %401 = vset.pattern.permute.xlu0 0
        %402 = vperm.xlu0 %401, %v379
        %v403 = vpop.permute.xlu0 %402
        %vm405 = vcmask 195584
        %v407 = vsel %vm405, %v370, 0
        %v410 = vsel %vm405, %v371, 0
        %v413 = vsel %vm405, %v372, 0
        %v416 = vsel %vm405, %v373, 0
        %v419 = vsel %vm405, %v374, 0
        %421 = vmatpush.msra.mxu0 0.0
        %422 = vmatpush.msra.mxu0 0.0
        %423 = vmatpush.msra.mxu0 0.0
        %424 = vmatpush.msra.mxu0 0.0
        %425 = vmatpush.msra.mxu0 0.0
        %426 = vmatpush.msra.mxu0 0.0
        %427 = vmatpush.msra.mxu0 0.0
        %428 = vmatpush.msra.mxu0 0.0
        %429 = vmatpush.msra.mxu0 0.0
        %430 = vmatpush.msra.mxu0 0.0
        %431 = vmatpush.msra.mxu0 0.0
        %432 = vmatpush.msra.mxu0 0.0
        %433 = vmatpush.msra.mxu0 0.0
        %434 = vmatpush.msra.mxu0 %v368
        %435 = vmatpush.msra.mxu0 %v366
        %436 = vmatpush.msra.mxu0 %v364
        %437 = vmatmul.f32.gmra.mxu0 %v407
        %v438 = vpop.f32.mrf.mxu0
        %v439 = vadd.f32 %v383, %v438
        %440 = vmatmul.f32.gmra.mxu0 %v410
        %v441 = vpop.f32.mrf.mxu0
        %v442 = vadd.f32 %v388, %v441
        %443 = vmatmul.f32.gmra.mxu0 %v413
        %v444 = vpop.f32.mrf.mxu0
        %v445 = vadd.f32 %v393, %v444
        %446 = vmatmul.f32.gmra.mxu0 %v416
        %v447 = vpop.f32.mrf.mxu0
        %v448 = vadd.f32 %v398, %v447
        %449 = vmatmul.f32.gmra.mxu0 %v419
        %v450 = vpop.f32.mrf.mxu0
        %v451 = vadd.f32 %v403, %v450
        %452 = vdwg.mxu0
        %453 = vmatpush.msra.mxu0 0.0
        %454 = vmatpush.msra.mxu0 0.0
        %455 = vmatpush.msra.mxu0 0.0
        %456 = vmatpush.msra.mxu0 0.0
        %457 = vmatpush.msra.mxu0 0.0
        %458 = vmatpush.msra.mxu0 0.0
        %459 = vmatpush.msra.mxu0 0.0
        %460 = vmatpush.msra.mxu0 0.0
        %461 = vmatpush.msra.mxu0 0.0
        %462 = vmatpush.msra.mxu0 0.0
        %463 = vmatpush.msra.mxu0 0.0
        %464 = vmatpush.msra.mxu0 0.0
        %465 = vmatpush.msra.mxu0 0.0
        %466 = vmatpush.msra.mxu0 %v369
        %467 = vmatpush.msra.mxu0 %v367
        %468 = vmatpush.msra.mxu0 %v365
        %469 = vmatmul.f32.gmra.mxu0 %v407
        %v470 = vpop.f32.mrf.mxu0
        %v471 = vadd.f32 %v383, %v470
        %472 = vmatmul.f32.gmra.mxu0 %v410
        %v473 = vpop.f32.mrf.mxu0
        %v474 = vadd.f32 %v388, %v473
        %475 = vmatmul.f32.gmra.mxu0 %v413
        %v476 = vpop.f32.mrf.mxu0
        %v477 = vadd.f32 %v393, %v476
        %478 = vmatmul.f32.gmra.mxu0 %v416
        %v479 = vpop.f32.mrf.mxu0
        %v480 = vadd.f32 %v398, %v479
        %481 = vmatmul.f32.gmra.mxu0 %v419
        %v482 = vpop.f32.mrf.mxu0
        %v483 = vadd.f32 %v403, %v482
        %484 = vdwg.mxu0
        %v485 = vmax.f32 %v439, 0.0
        %v486 = vmax.f32 %v471, 0.0
        %v487 = vmax.f32 %v442, 0.0
        %v488 = vmax.f32 %v474, 0.0
        %v489 = vmax.f32 %v445, 0.0
        %v490 = vmax.f32 %v477, 0.0
        %v491 = vmax.f32 %v448, 0.0
        %v492 = vmax.f32 %v480, 0.0
        %v493 = vmax.f32 %v451, 0.0
        %v494 = vmax.f32 %v483, 0.0
        %v495 = vld [vmem:[%s4] sm:$0xff]
        %v496 = vld [vmem:[%s4 + $0x8] sm:$0xff]
        %v497 = vld [vmem:[%s4 + $0x10] sm:$0xff]
        %v498 = vld [vmem:[%s4 + $0x18] sm:$0xff]
        %v499 = vld [vmem:[%s4 + $0x20] sm:$0x1]
        %vm500 = vcmask 326656
        %v502 = vsel %vm500, %v495, 0
        %v505 = vsel %vm500, %v496, 0
        %v508 = vsel %vm500, %v497, 0
        %v511 = vsel %vm500, %v498, 0
        %v514 = vsel %vm500, %v499, 0
        %516 = vmatpush.msra.mxu0 0.0
        %517 = vmatpush.msra.mxu0 0.0
        %518 = vmatpush.msra.mxu0 0.0
        %519 = vmatpush.msra.mxu0 0.0
        %520 = vmatpush.msra.mxu0 0.0
        %521 = vmatpush.msra.mxu0 0.0
        %522 = vmatpush.msra.mxu0 0.0
        %523 = vmatpush.msra.mxu0 0.0
        %524 = vmatpush.msra.mxu0 0.0
        %525 = vmatpush.msra.mxu0 0.0
        %526 = vmatpush.msra.mxu0 0.0
        %527 = vmatpush.msra.mxu0 %v493
        %528 = vmatpush.msra.mxu0 %v491
        %529 = vmatpush.msra.mxu0 %v489
        %530 = vmatpush.msra.mxu0 %v487
        %531 = vmatpush.msra.mxu0 %v485
        %532 = vmatmul.f32.gmra.mxu0 %v502
        %v533 = vpop.f32.mrf.mxu0
        %v534 = vadd.f32 0.0, %v533
        %535 = vmatmul.f32.gmra.mxu0 %v505
        %v536 = vpop.f32.mrf.mxu0
        %v537 = vadd.f32 0.0, %v536
        %538 = vmatmul.f32.gmra.mxu0 %v508
        %v539 = vpop.f32.mrf.mxu0
        %v540 = vadd.f32 0.0, %v539
        %541 = vmatmul.f32.gmra.mxu0 %v511
        %v542 = vpop.f32.mrf.mxu0
        %v543 = vadd.f32 0.0, %v542
        %544 = vmatmul.f32.gmra.mxu0 %v514
        %v545 = vpop.f32.mrf.mxu0
        %v546 = vadd.f32 0.0, %v545
        %547 = vdwg.mxu0
        %548 = vmatpush.msra.mxu0 0.0
        %549 = vmatpush.msra.mxu0 0.0
        %550 = vmatpush.msra.mxu0 0.0
        %551 = vmatpush.msra.mxu0 0.0
        %552 = vmatpush.msra.mxu0 0.0
        %553 = vmatpush.msra.mxu0 0.0
        %554 = vmatpush.msra.mxu0 0.0
        %555 = vmatpush.msra.mxu0 0.0
        %556 = vmatpush.msra.mxu0 0.0
        %557 = vmatpush.msra.mxu0 0.0
        %558 = vmatpush.msra.mxu0 0.0
        %559 = vmatpush.msra.mxu0 %v494
        %560 = vmatpush.msra.mxu0 %v492
        %561 = vmatpush.msra.mxu0 %v490
        %562 = vmatpush.msra.mxu0 %v488
        %563 = vmatpush.msra.mxu0 %v486
        %564 = vmatmul.f32.gmra.mxu0 %v502
        %v565 = vpop.f32.mrf.mxu0
        %v566 = vadd.f32 0.0, %v565
        %567 = vmatmul.f32.gmra.mxu0 %v505
        %v568 = vpop.f32.mrf.mxu0
        %v569 = vadd.f32 0.0, %v568
        %570 = vmatmul.f32.gmra.mxu0 %v508
        %v571 = vpop.f32.mrf.mxu0
        %v572 = vadd.f32 0.0, %v571
        %573 = vmatmul.f32.gmra.mxu0 %v511
        %v574 = vpop.f32.mrf.mxu0
        %v575 = vadd.f32 0.0, %v574
        %576 = vmatmul.f32.gmra.mxu0 %v514
        %v577 = vpop.f32.mrf.mxu0
        %v578 = vadd.f32 0.0, %v577
        %579 = vdwg.mxu0
        %v580 = vld [vmem:[%s5] sm:$0xff]
        %v581 = vld [vmem:[%s5 + $0x8] sm:$0xff]
        %v582 = vld [vmem:[%s5 + $0x10] sm:$0xff]
        %v583 = vld [vmem:[%s5 + $0x18] sm:$0xff]
        %585 = vset.pattern.permute.xlu0 0
        %586 = vperm.xlu0 %585, %v580
        %v587 = vpop.permute.xlu0 %586
        %590 = vset.pattern.permute.xlu0 0
        %591 = vperm.xlu0 %590, %v581
        %v592 = vpop.permute.xlu0 %591
        %595 = vset.pattern.permute.xlu0 0
        %596 = vperm.xlu0 %595, %v582
        %v597 = vpop.permute.xlu0 %596
        %600 = vset.pattern.permute.xlu0 0
        %601 = vperm.xlu0 %600, %v583
        %v602 = vpop.permute.xlu0 %601
        %v604 = vadd.f32 %v534, %v587
        %v605 = vadd.f32 %v566, %v587
        %v606 = vadd.f32 %v537, %v592
        %v607 = vadd.f32 %v569, %v592
        %v608 = vadd.f32 %v540, %v597
        %v609 = vadd.f32 %v572, %v597
        %v610 = vadd.f32 %v543, %v602
        %v611 = vadd.f32 %v575, %v602
        %v612 = vmax.f32 %v604, 0.0
        %v613 = vmax.f32 %v605, 0.0
        %v614 = vmax.f32 %v606, 0.0
        %v615 = vmax.f32 %v607, 0.0
        %v616 = vmax.f32 %v608, 0.0
        %v617 = vmax.f32 %v609, 0.0
        %v618 = vmax.f32 %v610, 0.0
        %v619 = vmax.f32 %v611, 0.0
        %v620 = vld [vmem:[#allocation2] sm:$0x1]
        %vm621 = vcmask 1040384
        %v622 = vsel %vm621, %v546, -inf
        %v623 = vsel %vm621, %v578, -inf
        %v624 = vmax.f32 %v622, %v623
        %625 = vmax.xlane.f32.xlu0 %v624
        %v626 = vpop.xlane.xlu0 %625
        %v627 = vmax.f32 %v620, %v626
        %v628 = vsub.f32 %v620, %v627
        %v629 = vmul.f32 %v628, 1.442695
        %v630 = vpow.pop %v629
        %632 = vset.pattern.permute.xlu0 0
        %633 = vperm.xlu0 %632, %v627
        %v634 = vpop.permute.xlu0 %633
        %v636 = vperm.slane %v634, 0
        %v637 = vsub.f32 %v546, %v636
        %v638 = vsub.f32 %v578, %v636
        %v639 = vmul.f32 %v637, 1.442695
        %v640 = vpow.pop %v639
        %v641 = vmul.f32 %v638, 1.442695
        %v642 = vpow.pop %v641
        %v643 = vld [vmem:[#allocation3] sm:$0x1]
        %v644 = vmul.f32 %v630, %v643
        %v645 = vsel %vm621, %v640, 0.0
        %v646 = vsel %vm621, %v642, 0.0
        %v647 = vadd.f32 %v645, %v646
        %648 = vadd.xlane.f32.xlu0 %v647
        %v649 = vpop.xlane.xlu0 %648
        %v650 = vadd.f32 %v644, %v649
        %vm651 = vcmask 0
        %652 = vst.msk [vmem:[#allocation3] sm:$0x1] %vm651, %v650
        %v653 = vld [vmem:[#allocation4] sm:$0x1]
        %655 = vset.pattern.permute.xlu0 0
        %656 = vperm.xlu0 %655, %v630
        %v657 = vpop.permute.xlu0 %656
        %v659 = vperm.slane %v657, 0
        %v660 = vmul.f32 %v659, %v653
        %v661 = vperm.slane %v640, 0
        %v662 = vperm.slane %v642, 0
        %v663 = vmul.f32 %v612, %v661
        %v664 = vmul.f32 %v613, %v662
        %v665 = vmul.f32 %v614, %v661
        %v666 = vmul.f32 %v615, %v662
        %v667 = vmul.f32 %v616, %v661
        %v668 = vmul.f32 %v617, %v662
        %v669 = vmul.f32 %v618, %v661
        %v670 = vmul.f32 %v619, %v662
        %v671 = vadd.f32 %v663, %v664
        %672 = vadd.xlane.f32.xlu0 %v671
        %v673 = vpop.xlane.xlu0 %672
        %v674 = vadd.f32 %v665, %v666
        %675 = vadd.xlane.f32.xlu0 %v674
        %v676 = vpop.xlane.xlu0 %675
        %v677 = vadd.f32 %v667, %v668
        %678 = vadd.xlane.f32.xlu0 %v677
        %v679 = vpop.xlane.xlu0 %678
        %v680 = vadd.f32 %v669, %v670
        %681 = vadd.xlane.f32.xlu0 %v680
        %v682 = vpop.xlane.xlu0 %681
        %v687 = vperm.slane %v673, 0
        %v688 = vperm.slane %v673, 1
        %v689 = vperm.slane %v673, 2
        %v690 = vperm.slane %v673, 3
        %v691 = vperm.slane %v673, 4
        %v692 = vperm.slane %v673, 5
        %v693 = vperm.slane %v673, 6
        %v694 = vperm.slane %v673, 7
        %v695 = vperm.slane %v676, 0
        %v696 = vperm.slane %v676, 1
        %v697 = vperm.slane %v676, 2
        %v698 = vperm.slane %v676, 3
        %v699 = vperm.slane %v676, 4
        %v700 = vperm.slane %v676, 5
        %v701 = vperm.slane %v676, 6
        %v702 = vperm.slane %v676, 7
        %v703 = vperm.slane %v679, 0
        %v704 = vperm.slane %v679, 1
        %v705 = vperm.slane %v679, 2
        %v706 = vperm.slane %v679, 3
        %v707 = vperm.slane %v679, 4
        %v708 = vperm.slane %v679, 5
        %v709 = vperm.slane %v679, 6
        %v710 = vperm.slane %v679, 7
        %v711 = vperm.slane %v682, 0
        %v712 = vperm.slane %v682, 1
        %v713 = vperm.slane %v682, 2
        %v714 = vperm.slane %v682, 3
        %v715 = vperm.slane %v682, 4
        %v716 = vperm.slane %v682, 5
        %v717 = vperm.slane %v682, 6
        %v718 = vperm.slane %v682, 7
        %719 = vst [vmem:[#allocation1] ss:$9 sm:$0xff] %v687
        %s720 = scalar_lea.vmem [#allocation1], 1
        %721 = vst [vmem:[%s720] ss:$9 sm:$0xff] %v688
        %s722 = scalar_lea.vmem [#allocation1], 2
        %723 = vst [vmem:[%s722] ss:$9 sm:$0xff] %v689
        %s724 = scalar_lea.vmem [#allocation1], 3
        %725 = vst [vmem:[%s724] ss:$9 sm:$0xff] %v690
        %s726 = scalar_lea.vmem [#allocation1], 4
        %727 = vst [vmem:[%s726] ss:$9 sm:$0xff] %v691
        %s728 = scalar_lea.vmem [#allocation1], 5
        %729 = vst [vmem:[%s728] ss:$9 sm:$0xff] %v692
        %s730 = scalar_lea.vmem [#allocation1], 6
        %731 = vst [vmem:[%s730] ss:$9 sm:$0xff] %v693
        %s732 = scalar_lea.vmem [#allocation1], 7
        %733 = vst [vmem:[%s732] ss:$9 sm:$0xff] %v694
        %v734 = vld [vmem:[#allocation1] sm:$0xff]
        %735 = vst [vmem:[#allocation1] ss:$9 sm:$0xff] %v695
        %736 = vst [vmem:[%s720] ss:$9 sm:$0xff] %v696
        %737 = vst [vmem:[%s722] ss:$9 sm:$0xff] %v697
        %738 = vst [vmem:[%s724] ss:$9 sm:$0xff] %v698
        %739 = vst [vmem:[%s726] ss:$9 sm:$0xff] %v699
        %740 = vst [vmem:[%s728] ss:$9 sm:$0xff] %v700
        %741 = vst [vmem:[%s730] ss:$9 sm:$0xff] %v701
        %742 = vst [vmem:[%s732] ss:$9 sm:$0xff] %v702
        %v743 = vld [vmem:[#allocation1] sm:$0xff]
        %744 = vst [vmem:[#allocation1] ss:$9 sm:$0xff] %v703
        %745 = vst [vmem:[%s720] ss:$9 sm:$0xff] %v704
        %746 = vst [vmem:[%s722] ss:$9 sm:$0xff] %v705
        %747 = vst [vmem:[%s724] ss:$9 sm:$0xff] %v706
        %748 = vst [vmem:[%s726] ss:$9 sm:$0xff] %v707
        %749 = vst [vmem:[%s728] ss:$9 sm:$0xff] %v708
        %750 = vst [vmem:[%s730] ss:$9 sm:$0xff] %v709
        %751 = vst [vmem:[%s732] ss:$9 sm:$0xff] %v710
        %v752 = vld [vmem:[#allocation1] sm:$0xff]
        %753 = vst [vmem:[#allocation1] ss:$9 sm:$0xff] %v711
        %754 = vst [vmem:[%s720] ss:$9 sm:$0xff] %v712
        %755 = vst [vmem:[%s722] ss:$9 sm:$0xff] %v713
        %756 = vst [vmem:[%s724] ss:$9 sm:$0xff] %v714
        %757 = vst [vmem:[%s726] ss:$9 sm:$0xff] %v715
        %758 = vst [vmem:[%s728] ss:$9 sm:$0xff] %v716
        %759 = vst [vmem:[%s730] ss:$9 sm:$0xff] %v717
        %760 = vst [vmem:[%s732] ss:$9 sm:$0xff] %v718
        %v761 = vld [vmem:[#allocation1] sm:$0xff]
        %762 = vset.pattern.permute.xlu0 0
        %763 = vperm.xlu0 %762, %v734
        %v764 = vpop.permute.xlu0 %763
        %765 = vset.pattern.permute.xlu0 0
        %766 = vperm.xlu0 %765, %v743
        %v767 = vpop.permute.xlu0 %766
        %768 = vset.pattern.permute.xlu0 0
        %769 = vperm.xlu0 %768, %v752
        %v770 = vpop.permute.xlu0 %769
        %771 = vset.pattern.permute.xlu0 0
        %772 = vperm.xlu0 %771, %v761
        %v773 = vpop.permute.xlu0 %772
        %v774 = vlaneseq
        %v775 = vand.u32 %v774, 127
        %v776 = vperm.slane %v764, %v775
        %v777 = vadd.s32 %v775, 4294967288
        %v778 = vperm.slane %v767, %v777
        %vm779 = vcmask 130112
        %v780 = vsel %vm779, %v778, %v776
        %v781 = vadd.s32 %v775, 4294967280
        %v782 = vperm.slane %v770, %v781
        %vm783 = vcmask 195712
        %v784 = vsel %vm783, %v782, %v780
        %v785 = vadd.s32 %v775, 4294967272
        %v786 = vperm.slane %v773, %v785
        %vm787 = vcmask 261312
        %v788 = vsel %vm787, %v786, %v784
        %v790 = vadd.f32 %v660, %v788
        %vm791 = vcmask 253952
        %792 = vst.msk [vmem:[#allocation4] sm:$0x1] %vm791, %v790
        %793 = vst.msk [vmem:[#allocation2] sm:$0x1] %vm651, %v627
        // Predicated region
        $region49: #{tpu_custom_call.1} parent=43 // pred_check
          %p794 = pneg %p333
        $region50: #{tpu_custom_call.1} parent=43 // pred_check_branch
          %796 = sbr.rel (%p794) target = $region52
        $region51: #{tpu_custom_call.1} parent=43 // pred_region
          %v797 = vld [vmem:[#allocation4] sm:$0x1]
          %v798 = vld [vmem:[#allocation3] sm:$0x1]
          %v799 = vmul.f32 %v798, 256.0
          %801 = vset.pattern.permute.xlu0 0
          %802 = vperm.xlu0 %801, %v799
          %v803 = vpop.permute.xlu0 %802
          %v805 = vperm.slane %v803, 0
          %v806 = vrcp.pop %v805
          %v807 = vmul.f32 %v805, %v806
          %v808 = vsub.f32 1.0, %v807
          %v809 = vmul.f32 %v806, %v808
          %v810 = vadd.f32 %v806, %v809
          %vm811 = vweird.f32 %v805
          %vm812 = vweird.f32 %v806
          %vm813 = vmor %vm811, %vm812
          %v814 = vsel %vm813, %v806, %v810
          %v815 = vand.u32 2147483647, %v805
          %vm816 = vcmp.eq.f32.partialorder %v815, 8.507059e+37
          %v817 = vand.u32 %v805, 2147483648
          %v818 = vor.u32 1.1754944e-38, %v817
          %v819 = vsel %vm816, %v818, %v814
          %v820 = vmul.f32 %v797, %v819
          %821 = vst.msk [vmem:[%s307] sm:$0x1] %vm791, %v820
        $region52: #{tpu_custom_call.1} parent=43 // pred_fallthru
          _
        %s822 = sand.u32 %s185, 1
        %s823 = scalar_lea.sflag [#allocation6], %s822
        %s824 = sand.u32 %s185, 1
        %s825 = scalar_lea.vmem [#allocation5], %s824
        // Predicated region
        $region53: #{tpu_custom_call.1} parent=43 // pred_check
          %p826 = pneg %p195
        $region54: #{tpu_custom_call.1} parent=43 // pred_check_branch
          %828 = sbr.rel (%p826) target = $region56
        $region55: #{tpu_custom_call.1} parent=43 // pred_region
          %830 = vsyncadd %s823, 0
          %s831 = scalar_lea.hbm %s6, %s24
          %s833 = sshll.u32 %s825, 4
          %s834 = int_to_ptr.vmem [resolvable:$true] %s833
          %s835 = sshll.u32 %s831, 4
          %s836 = int_to_ptr.hbm [resolvable:$true] %s835
          %838 = dma.vmem_to_hbm [thread:$0]  %s834, 16, %s836, %s823
        $region56: #{tpu_custom_call.1} parent=43 // pred_fallthru
          _
      $region44: #{tpu_custom_call.1} parent=5 // pred_fallthru
        _
      %p839 = scmp.le.s32.totalorder 2, %s15
      // Predicated region
      $region57: #{tpu_custom_call.1} parent=5 // pred_check
        %p840 = pneg %p839
      $region58: #{tpu_custom_call.1} parent=5 // pred_check_branch
        %842 = sbr.rel (%p840) target = $region60
      $region59: #{tpu_custom_call.1} parent=5 // pred_region
        %s843 = ssub.s32 %s15, 2
        // Predicated region
        $region61: #{tpu_custom_call.1} parent=59 // pred_check
          %p844 = pneg %p201
        $region62: #{tpu_custom_call.1} parent=59 // pred_check_branch
          %846 = sbr.rel (%p844) target = $region64
        $region63: #{tpu_custom_call.1} parent=59 // pred_region
          %s847 = sand.u32 %s186, 1
          %s848 = scalar_lea.sflag [#allocation6], %s847
          %s849 = sand.u32 %s186, 1
          %s850 = scalar_lea.vmem [#allocation5], %s849
          %852 = dma.done %s848, 16
        $region64: #{tpu_custom_call.1} parent=59 // pred_fallthru
          _
      $region60: #{tpu_custom_call.1} parent=5 // pred_fallthru
        _
    $region6: #{tpu_custom_call.1} parent=1 // loop_footer
      %s19 = sadd.s32 1, %s15
    $region7: #{tpu_custom_call.1} parent=1 // loop_footer_branch
      %14 = sbr.rel target = $region3
    $region8: #{tpu_custom_call.1} parent=1 // loop_exit
      _
    %853 = vsyncpa [#allocation6], 1
    %s854 = scalar_lea.sflag [#allocation6], 1
    %855 = vsyncpa %s854, 1

</llo_original>
